<compile_context>
chip_gen: v5e
topology: v5e:2x2
jax: 0.10.0
libtpu: 0.0.40
codegen_flags: <defaults>
</compile_context>

<pallas_src>
import functools

import jax
import jax.numpy as jnp
from jax.experimental import pallas as pl
from jax.experimental.pallas import tpu as pltpu

LANE = 128


def _round_up(x, m):
    return ((x + m - 1) // m) * m


def _choose_tile(batch, block_b):
    """Pick the batch tile TB.

    * batch <= block_b: one exact-size tile (block dims == full array dims,
      so no (8,128) divisibility issue and no padding at all).
    * batch  > block_b: tile count rounded up to an even number (v7x has two
      TensorCores; odd grids imbalance them), tile size rounded up to a
      multiple of 128 so the transposed output block stays lane-dense.
    """
    if batch <= block_b:
        return batch
    n = -(-batch // block_b)          # cdiv
    if n % 2:
        n += 1                        # even tile count for v7x megacore
    return _round_up(-(-batch // n), LANE)


def actor_kernel(x_ref, w1_ref, b1_ref, w2_ref, b2_ref, w3t_ref, b3t_ref,
                 maxat_ref, o_ref):
    cdtype = w1_ref.dtype  # MXU input dtype (bf16 or f32)

    # In-kernel cast of the streamed f32 state (saves a wrapper HBM pass).
    x = x_ref[...].astype(cdtype)

    # Layer 1: Linear + ReLU (f32 accumulate, f32 elementwise)
    h = jnp.dot(x, w1_ref[...], preferred_element_type=jnp.float32)
    h = jnp.maximum(h + b1_ref[...], 0.0)

    # Layer 2: Linear + ReLU
    h = jnp.dot(h.astype(cdtype), w2_ref[...],
                preferred_element_type=jnp.float32)
    h = jnp.maximum(h + b2_ref[...], 0.0)

    # Output layer, transposed: y^T = w3^T @ h^T  -> (action_dim, TB).
    # dot_general contracts both operands' last dims (standard q@k^T form).
    y_t = jax.lax.dot_general(
        w3t_ref[...], h.astype(cdtype),
        dimension_numbers=(((1,), (1,)), ((), ())),
        preferred_element_type=jnp.float32)

    # Bias + tanh + max_action scaling on the narrow (action_dim, TB) slab.
    y_t = jnp.tanh(y_t + b3t_ref[...])
    o_ref[...] = (maxat_ref[...] * y_t).astype(o_ref.dtype)


def prepare_params(params, max_action, use_bf16=True):
    """One-time parameter prep (hoisted out of the per-call path)."""
    cdtype = jnp.bfloat16 if use_bf16 else jnp.float32
    return {
        "w1": params["w1"].astype(cdtype),                        # [S, H1]
        "b1": params["b1"].reshape(1, -1).astype(jnp.float32),    # [1, H1]
        "w2": params["w2"].astype(cdtype),                        # [H1, H2]
        "b2": params["b2"].reshape(1, -1).astype(jnp.float32),    # [1, H2]
        "w3t": params["w3"].T.astype(cdtype),                     # [A, H2]
        "b3t": params["b3"].reshape(-1, 1).astype(jnp.float32),   # [A, 1]
        "maxat": max_action.reshape(-1, 1).astype(jnp.float32),   # [A, 1]
    }


@functools.partial(jax.jit, static_argnames=("block_b",))
def actor_forward(state, prep, *, block_b=2048):
    """state: [B, state_dim] f32; prep: output of prepare_params().
    Returns [B, action_dim] f32."""
    B, state_dim = state.shape
    h1 = prep["w1"].shape[1]
    h2 = prep["w2"].shape[1]
    action_dim = prep["w3t"].shape[0]

    TB = _choose_tile(B, block_b)
    grid = (pl.cdiv(B, TB),)

    cbytes = prep["w1"].dtype.itemsize
    sbytes = state.dtype.itemsize
    cost = pl.CostEstimate(
        flops=2 * B * (state_dim * h1 + h1 * h2 + h2 * action_dim),
        transcendentals=B * action_dim,                      # tanh (packed slab)
        bytes_accessed=(B * state_dim * sbytes               # state in (f32)
                        + (state_dim * h1 + h1 * h2 + h2 * action_dim) * cbytes
                        + (h1 + h2 + 2 * action_dim) * 4     # biases + max_action
                        + B * action_dim * 4),               # transposed output
    )

    const = lambda i: (0, 0)  # weights/biases resident across batch tiles

    out_t = pl.pallas_call(
        actor_kernel,
        out_shape=jax.ShapeDtypeStruct((action_dim, B), jnp.float32),
        grid=grid,
        in_specs=[
            pl.BlockSpec((TB, state_dim), lambda i: (i, 0)),   # state (streamed f32)
            pl.BlockSpec((state_dim, h1), const),              # w1
            pl.BlockSpec((1, h1), const),                      # b1
            pl.BlockSpec((h1, h2), const),                     # w2
            pl.BlockSpec((1, h2), const),                      # b2
            pl.BlockSpec((action_dim, h2), const),             # w3^T
            pl.BlockSpec((action_dim, 1), const),              # b3 (column)
            pl.BlockSpec((action_dim, 1), const),              # max_action (column)
        ],
        out_specs=pl.BlockSpec((action_dim, TB), lambda i: (0, i)),
        compiler_params=pltpu.CompilerParams(
            dimension_semantics=("parallel",)),
        cost_estimate=cost,
    )(state, prep["w1"], prep["b1"], prep["w2"], prep["b2"],
      prep["w3t"], prep["b3t"], prep["maxat"])

    # Tiny (action_dim, B) -> (B, action_dim) transpose in the wrapper.
    return out_t.T


def init_params(key, state_dim, hidden_sizes, action_dim):
    """Deterministic init mimicking torch.nn.Linear's U(-1/sqrt(fan_in), ...)."""
    dims = [state_dim] + list(hidden_sizes) + [action_dim]
    params = {}
    for i, name in enumerate(["1", "2", "3"]):
        fan_in, fan_out = dims[i], dims[i + 1]
        key, kw, kb = jax.random.split(key, 3)
        bound = 1.0 / float(fan_in) ** 0.5
        # stored as [in, out] (transposed vs PyTorch Linear)
        params["w" + name] = jax.random.uniform(
            kw, (fan_in, fan_out), jnp.float32, -bound, bound)
        params["b" + name] = jax.random.uniform(
            kb, (fan_out,), jnp.float32, -bound, bound)
    return params


def actor_reference(state, params, max_action, use_bf16=True):
    """Plain-JAX reference (same bf16 matmul casting as the kernel)."""
    cd = jnp.bfloat16 if use_bf16 else jnp.float32
    h = jnp.dot(state.astype(cd), params["w1"].astype(cd),
                preferred_element_type=jnp.float32) + params["b1"]
    h = jnp.maximum(h, 0.0)
    h = jnp.dot(h.astype(cd), params["w2"].astype(cd),
                preferred_element_type=jnp.float32) + params["b2"]
    h = jnp.maximum(h, 0.0)
    y = jnp.tanh(jnp.dot(h.astype(cd), params["w3"].astype(cd),
                         preferred_element_type=jnp.float32) + params["b3"])
    return max_action * y


def actor_reference_f32(state, params, max_action):
    h = jnp.maximum(state @ params["w1"] + params["b1"], 0.0)
    h = jnp.maximum(h @ params["w2"] + params["b2"], 0.0)
    return max_action * jnp.tanh(h @ params["w3"] + params["b3"])


if __name__ == "__main__":
    # Shapes consistent with Actor(state_dim, action_dim, hidden_sizes,
    # activation='ReLU', max_action)
    batch = 8
    state_dim = 16
    hidden_sizes = (32, 32)
    action_dim = 4

    key = jax.random.PRNGKey(0)
    key, k_state, k_state2 = jax.random.split(key, 3)
    params = init_params(key, state_dim, hidden_sizes, action_dim)
    max_action = jnp.full((action_dim,), 2.0, jnp.float32)  # registered buffer

    prep = prepare_params(params, max_action)  # one-time param prep

    # --- small single-tile case ---
    state = jax.random.normal(k_state, (batch, state_dim), jnp.float32)
    out = jax.block_until_ready(actor_forward(state, prep))
    ref = actor_reference(state, params, max_action)
    ref32 = actor_reference_f32(state, params, max_action)
    assert out.shape == (batch, action_dim)
    assert jnp.allclose(out, ref, atol=2e-3, rtol=2e-3), "mismatch vs bf16 ref"
    assert jnp.allclose(out, ref32, atol=3e-2, rtol=3e-2), "mismatch vs f32 ref"

    # --- larger, non-multiple-of-tile batch: exercises the grid + overhang ---
    batch2 = 1040
    state2 = jax.random.normal(k_state2, (batch2, state_dim), jnp.float32)
    out2 = jax.block_until_ready(actor_forward(state2, prep, block_b=256))
    ref2 = actor_reference(state2, params, max_action)
    assert out2.shape == (batch2, action_dim)
    assert jnp.allclose(out2, ref2, atol=2e-3, rtol=2e-3), "mismatch (tiled)"

    print("KERNEL_OK")
</pallas_src>

<mosaic_0001>
module attributes {stable_mosaic.version = 11 : i64} {
  func.func @actor_kernel(%arg0: i32, %arg1: memref<8x16xf32, #tpu.memory_space<vmem>>, %arg2: memref<16x32xbf16, #tpu.memory_space<vmem>>, %arg3: memref<1x32xf32, #tpu.memory_space<vmem>>, %arg4: memref<32x32xbf16, #tpu.memory_space<vmem>>, %arg5: memref<1x32xf32, #tpu.memory_space<vmem>>, %arg6: memref<4x32xbf16, #tpu.memory_space<vmem>>, %arg7: memref<4x1xf32, #tpu.memory_space<vmem>>, %arg8: memref<4x1xf32, #tpu.memory_space<vmem>>, %arg9: memref<4x8xf32, #tpu.memory_space<vmem>>) attributes {dimension_semantics = [#tpu.dimension_semantics<parallel>], iteration_bounds = array<i64: 1>, scalar_prefetch = 0 : i64, scratch_operands = 0 : i64, tpu.core_type = #tpu.core_type<tc>, window_params = [{transform_indices = @transform_0, window_bounds = array<i64: 8, 16>}, {pipeline_mode = #tpu.pipeline_mode<synchronous>, transform_indices = @transform_1, window_bounds = array<i64: 16, 32>}, {pipeline_mode = #tpu.pipeline_mode<synchronous>, transform_indices = @transform_2, window_bounds = array<i64: 1, 32>}, {pipeline_mode = #tpu.pipeline_mode<synchronous>, transform_indices = @transform_3, window_bounds = array<i64: 32, 32>}, {pipeline_mode = #tpu.pipeline_mode<synchronous>, transform_indices = @transform_4, window_bounds = array<i64: 1, 32>}, {pipeline_mode = #tpu.pipeline_mode<synchronous>, transform_indices = @transform_5, window_bounds = array<i64: 4, 32>}, {pipeline_mode = #tpu.pipeline_mode<synchronous>, transform_indices = @transform_6, window_bounds = array<i64: 4, 1>}, {pipeline_mode = #tpu.pipeline_mode<synchronous>, transform_indices = @transform_7, window_bounds = array<i64: 4, 1>}, {transform_indices = @transform_8, window_bounds = array<i64: 4, 8>}]} {
    %c0 = arith.constant 0 : index
    %c0_0 = arith.constant 0 : index
    %0 = vector.load %arg1[%c0, %c0_0] : memref<8x16xf32, #tpu.memory_space<vmem>>, vector<8x16xf32>
    %1 = arith.truncf %0 : vector<8x16xf32> to vector<8x16xbf16>
    %c0_1 = arith.constant 0 : index
    %c0_2 = arith.constant 0 : index
    %2 = vector.load %arg2[%c0_1, %c0_2] : memref<16x32xbf16, #tpu.memory_space<vmem>>, vector<16x32xbf16>
    %cst = arith.constant dense<0.000000e+00> : vector<8x32xf32>
    %3 = tpu.matmul %1, %2, %cst {dimension_numbers = #tpu.dot_dimension_numbers<[1], [0], [0], [1], [0, 0, 1, 1], [], []>} : vector<8x16xbf16>, vector<16x32xbf16>, vector<8x32xf32> -> vector<8x32xf32>
    %c0_3 = arith.constant 0 : index
    %c0_4 = arith.constant 0 : index
    %4 = vector.load %arg3[%c0_3, %c0_4] : memref<1x32xf32, #tpu.memory_space<vmem>>, vector<1x32xf32>
    %5 = vector.broadcast %4 : vector<1x32xf32> to vector<8x32xf32>
    %6 = arith.addf %3, %5 : vector<8x32xf32>
    %cst_5 = arith.constant 0.000000e+00 : f32
    %7 = vector.broadcast %cst_5 : f32 to vector<8x32xf32>
    %8 = arith.maximumf %6, %7 : vector<8x32xf32>
    %9 = arith.truncf %8 : vector<8x32xf32> to vector<8x32xbf16>
    %c0_6 = arith.constant 0 : index
    %c0_7 = arith.constant 0 : index
    %10 = vector.load %arg4[%c0_6, %c0_7] : memref<32x32xbf16, #tpu.memory_space<vmem>>, vector<32x32xbf16>
    %cst_8 = arith.constant dense<0.000000e+00> : vector<8x32xf32>
    %11 = tpu.matmul %9, %10, %cst_8 {dimension_numbers = #tpu.dot_dimension_numbers<[1], [0], [0], [1], [0, 0, 1, 1], [], []>} : vector<8x32xbf16>, vector<32x32xbf16>, vector<8x32xf32> -> vector<8x32xf32>
    %c0_9 = arith.constant 0 : index
    %c0_10 = arith.constant 0 : index
    %12 = vector.load %arg5[%c0_9, %c0_10] : memref<1x32xf32, #tpu.memory_space<vmem>>, vector<1x32xf32>
    %13 = vector.broadcast %12 : vector<1x32xf32> to vector<8x32xf32>
    %14 = arith.addf %11, %13 : vector<8x32xf32>
    %cst_11 = arith.constant 0.000000e+00 : f32
    %15 = vector.broadcast %cst_11 : f32 to vector<8x32xf32>
    %16 = arith.maximumf %14, %15 : vector<8x32xf32>
    %c0_12 = arith.constant 0 : index
    %c0_13 = arith.constant 0 : index
    %17 = vector.load %arg6[%c0_12, %c0_13] : memref<4x32xbf16, #tpu.memory_space<vmem>>, vector<4x32xbf16>
    %18 = arith.truncf %16 : vector<8x32xf32> to vector<8x32xbf16>
    %cst_14 = arith.constant dense<0.000000e+00> : vector<4x8xf32>
    %19 = tpu.matmul %17, %18, %cst_14 {dimension_numbers = #tpu.dot_dimension_numbers<[1], [1], [0], [0], [0, 0, 1, 0], [], []>} : vector<4x32xbf16>, vector<8x32xbf16>, vector<4x8xf32> -> vector<4x8xf32>
    %c0_15 = arith.constant 0 : index
    %c0_16 = arith.constant 0 : index
    %20 = vector.load %arg7[%c0_15, %c0_16] : memref<4x1xf32, #tpu.memory_space<vmem>>, vector<4x1xf32>
    %21 = vector.broadcast %20 : vector<4x1xf32> to vector<4x8xf32>
    %22 = arith.addf %19, %21 : vector<4x8xf32>
    %23 = math.tanh %22 : vector<4x8xf32>
    %c0_17 = arith.constant 0 : index
    %c0_18 = arith.constant 0 : index
    %24 = vector.load %arg8[%c0_17, %c0_18] : memref<4x1xf32, #tpu.memory_space<vmem>>, vector<4x1xf32>
    %25 = vector.broadcast %24 : vector<4x1xf32> to vector<4x8xf32>
    %26 = arith.mulf %25, %23 : vector<4x8xf32>
    %c0_19 = arith.constant 0 : index
    %c0_20 = arith.constant 0 : index
    %27 = vector.load %arg9[%c0_19, %c0_20] : memref<4x8xf32, #tpu.memory_space<vmem>>, vector<4x8xf32>
    tpu.vector_store %arg9[%c0_19, %c0_20], %26 {strides = array<i32>} : memref<4x8xf32, #tpu.memory_space<vmem>>, vector<4x8xf32>,
    return
  }
  func.func @transform_0(%arg0: i32) -> (i32, i32) {
    %c0_i32 = arith.constant 0 : i32
    %c0_i32_0 = arith.constant 0 : i32
    return %arg0, %c0_i32 : i32, i32
  }
  func.func @transform_1(%arg0: i32) -> (i32, i32) {
    %c0_i32 = arith.constant 0 : i32
    %c0_i32_0 = arith.constant 0 : i32
    %c0_i32_1 = arith.constant 0 : i32
    return %c0_i32, %c0_i32_0 : i32, i32
  }
  func.func @transform_2(%arg0: i32) -> (i32, i32) {
    %c0_i32 = arith.constant 0 : i32
    %c0_i32_0 = arith.constant 0 : i32
    %c0_i32_1 = arith.constant 0 : i32
    return %c0_i32, %c0_i32_0 : i32, i32
  }
  func.func @transform_3(%arg0: i32) -> (i32, i32) {
    %c0_i32 = arith.constant 0 : i32
    %c0_i32_0 = arith.constant 0 : i32
    %c0_i32_1 = arith.constant 0 : i32
    return %c0_i32, %c0_i32_0 : i32, i32
  }
  func.func @transform_4(%arg0: i32) -> (i32, i32) {
    %c0_i32 = arith.constant 0 : i32
    %c0_i32_0 = arith.constant 0 : i32
    %c0_i32_1 = arith.constant 0 : i32
    return %c0_i32, %c0_i32_0 : i32, i32
  }
  func.func @transform_5(%arg0: i32) -> (i32, i32) {
    %c0_i32 = arith.constant 0 : i32
    %c0_i32_0 = arith.constant 0 : i32
    %c0_i32_1 = arith.constant 0 : i32
    return %c0_i32, %c0_i32_0 : i32, i32
  }
  func.func @transform_6(%arg0: i32) -> (i32, i32) {
    %c0_i32 = arith.constant 0 : i32
    %c0_i32_0 = arith.constant 0 : i32
    %c0_i32_1 = arith.constant 0 : i32
    return %c0_i32, %c0_i32_0 : i32, i32
  }
  func.func @transform_7(%arg0: i32) -> (i32, i32) {
    %c0_i32 = arith.constant 0 : i32
    %c0_i32_0 = arith.constant 0 : i32
    %c0_i32_1 = arith.constant 0 : i32
    return %c0_i32, %c0_i32_0 : i32, i32
  }
  func.func @transform_8(%arg0: i32) -> (i32, i32) {
    %c0_i32 = arith.constant 0 : i32
    %c0_i32_0 = arith.constant 0 : i32
    return %c0_i32, %arg0 : i32, i32
  }
}

</mosaic_0001>

<llo_original>
// kernel: actor_forward.1
$region0: #{actor_forward.1}
  #allocation0 [shape = 'u32[]', space=smem, size = 0x4, offset = 0x4, fixed_abs, tag = 'smem constant byte address 0x4 - core index']
  #allocation1 [shape = 'u32[72,128]{1,0:T(1,128)}', space=vmem, size = 0x9000, scoped, tag = 'internal scratch']
  %s0 = inlined_call_operand.vmem [shape: f32[8,16], index: 0, kind: input, shape index: {}]
  %s1 = inlined_call_operand.hbm [shape: bf16[16,32], index: 1, kind: input, shape index: {}]
  %s2 = inlined_call_operand.hbm [shape: f32[1,32], index: 2, kind: input, shape index: {}]
  %s3 = inlined_call_operand.hbm [shape: bf16[32,32], index: 3, kind: input, shape index: {}]
  %s4 = inlined_call_operand.hbm [shape: f32[1,32], index: 4, kind: input, shape index: {}]
  %s5 = inlined_call_operand.vmem [shape: bf16[4,32], index: 5, kind: input, shape index: {}]
  %s6 = inlined_call_operand.vmem [shape: f32[4,1], index: 6, kind: input, shape index: {}]
  %s7 = inlined_call_operand.vmem [shape: f32[4,1], index: 7, kind: input, shape index: {}]
  %s8 = inlined_call_operand.hbm [shape: f32[4,8], index: 8, kind: output, shape index: {}]
  %s9 = sld [smem:[#allocation0]]
  $region58: #{actor_forward.1} parent=0
    _
  %s11 = ssub.s32 1, %s9
  %s12 = scalar_select 0, %s11, %s9
  $region1: #{actor_forward.1} parent=0
    #allocation2 [shape = 'u8[4096]{0}', space=vmem, size = 0x1000, scoped, tag = 'input window, operand 1, single buffered']
    #allocation3 [shape = 's32[1]{0}', space=sflag, size = 0x4, scoped, tag = 'scoped memory for actor_forward.1']
    #allocation4 [shape = 's32[1]{0}', space=sflag, size = 0x4, scoped, tag = 'scoped memory for actor_forward.1']
    #allocation5 [shape = 'u8[512]{0}', space=vmem, size = 0x400, scoped, tag = 'input window, operand 2, single buffered']
    #allocation6 [shape = 's32[1]{0}', space=sflag, size = 0x4, scoped, tag = 'scoped memory for actor_forward.1']
    #allocation7 [shape = 'u8[8192]{0}', space=vmem, size = 0x2000, scoped, tag = 'input window, operand 3, single buffered']
    #allocation8 [shape = 'u8[512]{0}', space=vmem, size = 0x400, scoped, tag = 'input window, operand 4, single buffered']
    #allocation9 [shape = 's32[1]{0}', space=sflag, size = 0x4, scoped, tag = 'scoped memory for actor_forward.1']
    #allocation10 [shape = 'u8[2048]{0}', space=vmem, size = 0x800, scoped, tag = 'output window, operand 0, single buffered']
    %13 = vsyncpa [#allocation3], 0
    %14 = vsyncpa [#allocation6], 0
    %15 = vsyncpa [#allocation9], 0
    %16 = vsyncpa [#allocation4], 0
    // Predicated region
    $region2: #{actor_forward.1} parent=1 // pred_check
      _
    $region3: #{actor_forward.1} parent=1 // pred_check_branch
      %18 = sbr.rel (0) target = $region5
    $region4: #{actor_forward.1} parent=1 // pred_region
      _
    $region5: #{actor_forward.1} parent=1 // pred_fallthru
      _
    // Predicated region
    $region6: #{actor_forward.1} parent=1 // pred_check
      _
    $region7: #{actor_forward.1} parent=1 // pred_check_branch
      %20 = sbr.rel (0) target = $region9
    $region8: #{actor_forward.1} parent=1 // pred_region
      %22 = vsyncadd [#allocation3], 0
      %s23 = sshll.u32 %s1, 4
      %s24 = int_to_ptr.hbm [resolvable:$true] %s23
      %s25 = sshll.u32 [#allocation2], 4
      %s26 = int_to_ptr.vmem [resolvable:$true] %s25
      %31 = dma.hbm_to_vmem [thread:$0]  %s24, 128, %s26, [#allocation3], 64, 64, 4
    $region9: #{actor_forward.1} parent=1 // pred_fallthru
      _
    // Predicated region
    $region10: #{actor_forward.1} parent=1 // pred_check
      _
    $region11: #{actor_forward.1} parent=1 // pred_check_branch
      %33 = sbr.rel (0) target = $region13
    $region12: #{actor_forward.1} parent=1 // pred_region
      %35 = vsyncadd [#allocation6], 0
      %s37 = sshll.u32 %s2, 4
      %s38 = int_to_ptr.hbm [resolvable:$true] %s37
      %s39 = sshll.u32 [#allocation5], 4
      %s40 = int_to_ptr.vmem [resolvable:$true] %s39
      %42 = dma.hbm_to_vmem [thread:$0]  %s38, 16, %s40, [#allocation6]
    $region13: #{actor_forward.1} parent=1 // pred_fallthru
      _
    // Predicated region
    $region14: #{actor_forward.1} parent=1 // pred_check
      _
    $region15: #{actor_forward.1} parent=1 // pred_check_branch
      %44 = sbr.rel (0) target = $region17
    $region16: #{actor_forward.1} parent=1 // pred_region
      %46 = vsyncadd [#allocation6], 0
      %s47 = sshll.u32 %s3, 4
      %s48 = int_to_ptr.hbm [resolvable:$true] %s47
      %s49 = sshll.u32 [#allocation7], 4
      %s50 = int_to_ptr.vmem [resolvable:$true] %s49
      %55 = dma.hbm_to_vmem [thread:$0]  %s48, 256, %s50, [#allocation6], 64, 64, 4
    $region17: #{actor_forward.1} parent=1 // pred_fallthru
      _
    // Predicated region
    $region18: #{actor_forward.1} parent=1 // pred_check
      _
    $region19: #{actor_forward.1} parent=1 // pred_check_branch
      %57 = sbr.rel (0) target = $region21
    $region20: #{actor_forward.1} parent=1 // pred_region
      %59 = vsyncadd [#allocation9], 0
      %s61 = sshll.u32 %s4, 4
      %s62 = int_to_ptr.hbm [resolvable:$true] %s61
      %s63 = sshll.u32 [#allocation8], 4
      %s64 = int_to_ptr.vmem [resolvable:$true] %s63
      %66 = dma.hbm_to_vmem [thread:$0]  %s62, 16, %s64, [#allocation9]
    $region21: #{actor_forward.1} parent=1 // pred_fallthru
      _
    // Predicated region
    $region22: #{actor_forward.1} parent=1 // pred_check
      _
    $region23: #{actor_forward.1} parent=1 // pred_check_branch
      %68 = sbr.rel (0) target = $region25
    $region24: #{actor_forward.1} parent=1 // pred_region
      _
    $region25: #{actor_forward.1} parent=1 // pred_fallthru
      _
    // Predicated region
    $region26: #{actor_forward.1} parent=1 // pred_check
      _
    $region27: #{actor_forward.1} parent=1 // pred_check_branch
      %70 = sbr.rel (0) target = $region29
    $region28: #{actor_forward.1} parent=1 // pred_region
      _
    $region29: #{actor_forward.1} parent=1 // pred_fallthru
      _
    // Predicated region
    $region30: #{actor_forward.1} parent=1 // pred_check
      _
    $region31: #{actor_forward.1} parent=1 // pred_check_branch
      %72 = sbr.rel (0) target = $region33
    $region32: #{actor_forward.1} parent=1 // pred_region
      _
    $region33: #{actor_forward.1} parent=1 // pred_fallthru
      _
    // Predicated region
    $region34: #{actor_forward.1} parent=1 // pred_check
      _
    $region35: #{actor_forward.1} parent=1 // pred_check_branch
      %74 = sbr.rel (0) target = $region37
    $region36: #{actor_forward.1} parent=1 // pred_region
      %76 = dma.done [#allocation3], 128
    $region37: #{actor_forward.1} parent=1 // pred_fallthru
      _
    // Predicated region
    $region38: #{actor_forward.1} parent=1 // pred_check
      _
    $region39: #{actor_forward.1} parent=1 // pred_check_branch
      %78 = sbr.rel (0) target = $region41
    $region40: #{actor_forward.1} parent=1 // pred_region
      %80 = dma.done [#allocation6], 16
    $region41: #{actor_forward.1} parent=1 // pred_fallthru
      _
    // Predicated region
    $region42: #{actor_forward.1} parent=1 // pred_check
      _
    $region43: #{actor_forward.1} parent=1 // pred_check_branch
      %82 = sbr.rel (0) target = $region45
    $region44: #{actor_forward.1} parent=1 // pred_region
      %84 = dma.done [#allocation6], 256
    $region45: #{actor_forward.1} parent=1 // pred_fallthru
      _
    // Predicated region
    $region46: #{actor_forward.1} parent=1 // pred_check
      _
    $region47: #{actor_forward.1} parent=1 // pred_check_branch
      %86 = sbr.rel (0) target = $region49
    $region48: #{actor_forward.1} parent=1 // pred_region
      %88 = dma.done [#allocation9], 16
    $region49: #{actor_forward.1} parent=1 // pred_fallthru
      _
    %v90 = vld [vmem:[%s0] sm:$0xff]
    %v91 = vpack.c.bf16 %v90, %v90
    %v92 = vld [vmem:[#allocation2] sm:$0xf]
    %v93 = vld [vmem:[#allocation2 + $0x4] sm:$0xf]
    %v94 = vld [vmem:[#allocation5] sm:$0x1]
    %v96 = vperm.slane %v94, 0
    %v100 = vunpack.c.l.b16 %v92
    %v101 = vunpack.c.l.b16 %v93
    %v102 = vpack.c.b16 %v101, %v100
    %vm104 = vcmask 130048
    %v106 = vsel %vm104, %v91, 0
    %108 = vmatpush.bf16.msra.mxu0 0
    %109 = vmatpush.bf16.msra.mxu0 0
    %110 = vmatpush.bf16.msra.mxu0 0
    %111 = vmatpush.bf16.msra.mxu0 0
    %112 = vmatpush.bf16.msra.mxu0 0
    %113 = vmatpush.bf16.msra.mxu0 0
    %114 = vmatpush.bf16.msra.mxu0 0
    %115 = vmatpush.bf16.msra.mxu0 %v102
    %116 = vmatmul.bf16.gmra.mxu0 %v106
    %v117 = vpop.f32.mrf.mxu0
    %v118 = vadd.f32 %v96, %v117
    %v119 = vpop.f32.mrf.mxu0
    %120 = vdwg.mxu0
    %v121 = vmax.f32 %v118, 0.0
    %v122 = vpack.c.bf16 %v121, %v121
    %v123 = vld [vmem:[#allocation7] sm:$0xf]
    %v124 = vld [vmem:[#allocation7 + $0x4] sm:$0xf]
    %v125 = vld [vmem:[#allocation7 + $0x8] sm:$0xf]
    %v126 = vld [vmem:[#allocation7 + $0xc] sm:$0xf]
    %v127 = vld [vmem:[#allocation8] sm:$0x1]
    %v129 = vperm.slane %v127, 0
    %v135 = vunpack.c.l.b16 %v123
    %v136 = vunpack.c.l.b16 %v124
    %v137 = vunpack.c.l.b16 %v125
    %v138 = vunpack.c.l.b16 %v126
    %v139 = vpack.c.b16 %v136, %v135
    %v140 = vpack.c.b16 %v138, %v137
    %vm143 = vcmask 261120
    %v145 = vsel %vm143, %v122, 0
    %147 = vmatpush.bf16.msra.mxu0 0
    %148 = vmatpush.bf16.msra.mxu0 0
    %149 = vmatpush.bf16.msra.mxu0 0
    %150 = vmatpush.bf16.msra.mxu0 0
    %151 = vmatpush.bf16.msra.mxu0 0
    %152 = vmatpush.bf16.msra.mxu0 0
    %153 = vmatpush.bf16.msra.mxu0 %v140
    %154 = vmatpush.bf16.msra.mxu0 %v139
    %155 = vmatmul.bf16.gmra.mxu0 %v145
    %v156 = vpop.f32.mrf.mxu0
    %v157 = vadd.f32 %v129, %v156
    %v158 = vpop.f32.mrf.mxu0
    %159 = vdwg.mxu0
    %v160 = vmax.f32 %v157, 0.0
    %v161 = vld [vmem:[%s5] sm:$0x3]
    %v162 = vpack.c.bf16 %v160, %v160
    %v163 = vld [vmem:[%s6] sm:$0xf]
    %165 = vset.pattern.permute.xlu0 0
    %166 = vperm.xlu0 %165, %v163
    %v167 = vpop.permute.xlu0 %166
    %v170 = vsel %vm143, %v161, 0
    %v173 = vsel %vm143, %v162, 0
    %175 = vmatpush.bf16.xpose.msra.mxu0 0
    %176 = vmatpush.bf16.xpose.msra.mxu0 0
    %177 = vmatpush.bf16.xpose.msra.mxu0 0
    %178 = vmatpush.bf16.xpose.msra.mxu0 0
    %179 = vmatpush.bf16.xpose.msra.mxu0 0
    %180 = vmatpush.bf16.xpose.msra.mxu0 0
    %181 = vmatpush.bf16.xpose.msra.mxu0 0
    %182 = vmatpush.bf16.xpose.msra.mxu0 %v173
    %183 = vmatmul.bf16.gmra.mxu0 %v170
    %v184 = vpop.f32.mrf.mxu0
    %v185 = vadd.f32 %v167, %v184
    %v186 = vpop.f32.mrf.mxu0
    %187 = vdwg.mxu0
    %v188 = vtanh.pop %v185
    %v189 = vld [vmem:[%s7] sm:$0xf]
    %191 = vset.pattern.permute.xlu0 0
    %192 = vperm.xlu0 %191, %v189
    %v193 = vpop.permute.xlu0 %192
    %v195 = vmul.f32 %v193, %v188
    %vm196 = vcmask 60416
    %197 = vst.msk [vmem:[#allocation10] sm:$0xf] %vm196, %v195
    // Predicated region
    $region50: #{actor_forward.1} parent=1 // pred_check
      _
    $region51: #{actor_forward.1} parent=1 // pred_check_branch
      %199 = sbr.rel (0) target = $region53
    $region52: #{actor_forward.1} parent=1 // pred_region
      %201 = vsyncadd [#allocation4], 0
      %s203 = sshll.u32 [#allocation10], 4
      %s204 = int_to_ptr.vmem [resolvable:$true] %s203
      %s205 = sshll.u32 %s8, 4
      %s206 = int_to_ptr.hbm [resolvable:$true] %s205
      %208 = dma.vmem_to_hbm [thread:$0]  %s204, 64, %s206, [#allocation4]
    $region53: #{actor_forward.1} parent=1 // pred_fallthru
      _
    // Predicated region
    $region54: #{actor_forward.1} parent=1 // pred_check
      _
    $region55: #{actor_forward.1} parent=1 // pred_check_branch
      %210 = sbr.rel (0) target = $region57
    $region56: #{actor_forward.1} parent=1 // pred_region
      %212 = dma.done [#allocation4], 64
    $region57: #{actor_forward.1} parent=1 // pred_fallthru
      _
    %213 = vsyncpa [#allocation3], 1
    %214 = vsyncpa [#allocation6], 1
    %215 = vsyncpa [#allocation9], 1
    %216 = vsyncpa [#allocation4], 1

</llo_original>
